<compile_context>
chip_gen: v7x
topology: tpu7x:2x2x1
jax: 0.10.0
libtpu: 0.0.40
codegen_flags: <defaults>
</compile_context>

<pallas_src>
import functools
import math

import jax
import jax.numpy as jnp
import numpy as np
from jax.experimental import pallas as pl
from jax.experimental.pallas import tpu as pltpu

LEAKY_SLOPE = 0.01  # torch.nn.LeakyReLU default negative_slope


def _round_up(x, m):
    return ((x + m - 1) // m) * m


def _pad2(a, shape):
    """Zero-pad a 2-D array up to `shape`."""
    return jnp.pad(a, ((0, shape[0] - a.shape[0]), (0, shape[1] - a.shape[1])))


def _mlp_kernel(x_ref, w0_ref, b0_ref, w1_ref, b1_ref, w2_ref, b2_ref, o_ref):
    """Fused 3-layer MLP (Linear+LeakyReLU, Linear+LeakyReLU, Linear).

    Matmul operands are the weight dtype (bf16 or f32) with f32 accumulation;
    bias add / LeakyReLU are f32.  x arrives as f32 and is cast in-kernel.
    """
    mm_dtype = w0_ref.dtype
    x = x_ref[...].astype(mm_dtype)

    h = jnp.dot(x, w0_ref[...], preferred_element_type=jnp.float32) + b0_ref[...]
    h = jnp.maximum(h, LEAKY_SLOPE * h)

    h = jnp.dot(h.astype(mm_dtype), w1_ref[...],
                preferred_element_type=jnp.float32) + b1_ref[...]
    h = jnp.maximum(h, LEAKY_SLOPE * h)

    out = jnp.dot(h.astype(mm_dtype), w2_ref[...],
                  preferred_element_type=jnp.float32) + b2_ref[...]

    # Output block is only out_size (45) lanes wide: masked vst, far fewer
    # writeback bytes than a padded-128 store; padded weight columns are zero
    # anyway so the dropped lanes carry no information.
    o_ref[...] = out[:, : o_ref.shape[1]].astype(o_ref.dtype)


def prepare_params(params, *, use_bf16=True):
    """One-time: pad hidden/output widths to 128 lanes and cast dtypes.

    params: ((w0,b0), (w1,b1), (w2,b2)) with wi (in_i, out_i), bi (1, out_i)
    returns (prepared_arrays_tuple, out_size)
    """
    (w0, b0), (w1, b1), (w2, b2) = params
    in_size = w0.shape[0]
    h0p = _round_up(w0.shape[1], 128)
    h1p = _round_up(w1.shape[1], 128)
    outp = _round_up(w2.shape[1], 128)

    mm_dtype = jnp.bfloat16 if use_bf16 else jnp.float32
    w0p = _pad2(w0, (in_size, h0p)).astype(mm_dtype)
    w1p = _pad2(w1, (h0p, h1p)).astype(mm_dtype)
    w2p = _pad2(w2, (h1p, outp)).astype(mm_dtype)
    b0p = _pad2(b0, (1, h0p)).astype(jnp.float32)
    b1p = _pad2(b1, (1, h1p)).astype(jnp.float32)
    b2p = _pad2(b2, (1, outp)).astype(jnp.float32)

    out_size = int(w2.shape[1])
    return (w0p, b0p, w1p, b1p, w2p, b2p), out_size


def _pick_batch_tile(B, *, max_tile=1024, min_tiles=2):
    """Batch tile minimizing fixed per-step overhead and padding waste.

    >= 2 tiles whenever B >= 16 so v7x megacore shards the grid; tile rounded
    up to a sublane multiple (8).  VMEM is never the constraint here.
    """
    B8 = _round_up(B, 8)
    if B < 16:
        return B8
    n_tiles = max(pl.cdiv(B, max_tile), min_tiles)
    return min(_round_up(pl.cdiv(B, n_tiles), 8), B8)


@functools.partial(jax.jit, static_argnames=("out_size", "max_tile", "min_tiles"))
def gmm_net_forward(state, prepared, *, out_size, max_tile=1024, min_tiles=2):
    """Pallas forward for GaussianMixtureModelNet.

    state:    (B, input_size) float32
    prepared: array tuple from prepare_params()
    returns   (B, out_size) float32
    """
    w0p, b0p, w1p, b1p, w2p, b2p = prepared
    B, in_size = state.shape
    h0p, h1p, outp = w0p.shape[1], w1p.shape[1], w2p.shape[1]

    bt = _pick_batch_tile(B, max_tile=max_tile, min_tiles=min_tiles)
    grid = (pl.cdiv(B, bt),)  # ragged last tile: OOB reads are garbage rows,
                              # their output rows are OOB and dropped on store.

    def full(a):
        nd = a.ndim
        return pl.BlockSpec(a.shape, lambda i: (0,) * nd)

    mm_bytes = jnp.dtype(w0p.dtype).itemsize
    flops = 2 * B * (in_size * h0p + h0p * h1p + h1p * outp)
    bytes_accessed = (
        B * in_size * 4                                         # x in (f32)
        + B * out_size * 4                                      # out (f32, 45 wide)
        + (in_size * h0p + h0p * h1p + h1p * outp) * mm_bytes   # weights
        + (h0p + h1p + outp) * 4                                # biases
    )

    return pl.pallas_call(
        _mlp_kernel,
        out_shape=jax.ShapeDtypeStruct((B, out_size), jnp.float32),
        grid_spec=pltpu.PrefetchScalarGridSpec(
            num_scalar_prefetch=0,
            grid=grid,
            in_specs=[
                pl.BlockSpec((bt, in_size), lambda i: (i, 0)),  # x tile over batch
                full(w0p), full(b0p),   # grid-invariant weights/biases stay resident
                full(w1p), full(b1p),
                full(w2p), full(b2p),
            ],
            out_specs=pl.BlockSpec((bt, out_size), lambda i: (i, 0)),
        ),
        compiler_params=pltpu.CompilerParams(
            dimension_semantics=("parallel",)   # batch axis -> megacore sharding on v7x
        ),
        cost_estimate=pl.CostEstimate(
            flops=flops, transcendentals=0, bytes_accessed=bytes_accessed),
    )(state, w0p, b0p, w1p, b1p, w2p, b2p)


def init_linear(key, fan_in, fan_out):
    """Deterministic init mimicking torch.nn.Linear (uniform +-1/sqrt(fan_in))."""
    kw, kb = jax.random.split(key)
    bound = 1.0 / math.sqrt(fan_in)
    w = jax.random.uniform(kw, (fan_in, fan_out), jnp.float32, -bound, bound)
    b = jax.random.uniform(kb, (1, fan_out), jnp.float32, -bound, bound)
    return w, b


def reference_forward(state, params):
    (w0, b0), (w1, b1), (w2, b2) = params
    h = state @ w0 + b0
    h = jnp.where(h > 0, h, LEAKY_SLOPE * h)
    h = h @ w1 + b1
    h = jnp.where(h > 0, h, LEAKY_SLOPE * h)
    return h @ w2 + b2


if __name__ == "__main__":
    # Module hyper-parameters (small, consistent with the PyTorch __init__):
    #   input_size=32, hidden_layers=[64, 64], output_size=4, mixture_count=5
    #   => network_output_size = mixture_count * (1 + 2 * output_size) = 45
    input_size = 32
    hidden_layers = [64, 64]
    output_size = 4
    mixture_count = 5
    network_output_size = mixture_count * (1 + 2 * output_size)  # 45

    sizes = [input_size] + hidden_layers + [network_output_size]

    key = jax.random.PRNGKey(0)
    k_state, k_state2, k0, k1, k2 = jax.random.split(key, 5)

    params = (
        init_linear(k0, sizes[0], sizes[1]),
        init_linear(k1, sizes[1], sizes[2]),
        init_linear(k2, sizes[2], sizes[3]),
    )

    # One-time padded/cast parameter bundles (hoisted out of the forward call).
    prep_f32, out_sz = prepare_params(params, use_bf16=False)
    prep_bf16, _ = prepare_params(params, use_bf16=True)

    # --- small batch (the module's typical per-step call), exact f32 path ---
    batch = 8
    state = jax.random.normal(k_state, (batch, input_size), jnp.float32)
    out_f32 = jax.block_until_ready(
        gmm_net_forward(state, prep_f32, out_size=out_sz))
    ref = jax.block_until_ready(reference_forward(state, params))
    assert out_f32.shape == (batch, network_output_size)
    np.testing.assert_allclose(np.asarray(out_f32), np.asarray(ref),
                               rtol=1e-5, atol=1e-5)

    # bf16 matmul path (default), loose tolerance vs f32 reference
    out_bf16 = jax.block_until_ready(
        gmm_net_forward(state, prep_bf16, out_size=out_sz))
    np.testing.assert_allclose(np.asarray(out_bf16), np.asarray(ref),
                               rtol=2e-2, atol=2e-2)

    # --- larger, non-divisible batch: bt=152, grid=2 (two TCs on v7x), ragged
    #     last tile handled by OOB-dropped rows instead of wrapper jnp.pad ---
    batch2 = 300
    state2 = jax.random.normal(k_state2, (batch2, input_size), jnp.float32)
    out2 = jax.block_until_ready(
        gmm_net_forward(state2, prep_bf16, out_size=out_sz))
    ref2 = jax.block_until_ready(reference_forward(state2, params))
    assert out2.shape == (batch2, network_output_size)
    np.testing.assert_allclose(np.asarray(out2), np.asarray(ref2),
                               rtol=2e-2, atol=2e-2)

    # TODO(synk): get_prediction / compute_loss (tanh mu scaling, Categorical +
    # MixtureSameFamily sampling & log_prob) are inference/training heads outside
    # forward(); they are not reproduced here (could be a follow-on fused kernel).

    print("KERNEL_OK")
</pallas_src>

<mosaic_0001>
module attributes {stable_mosaic.version = 11 : i64} {
  func.func @_mlp_kernel(%arg0: i32, %arg1: memref<8x32xf32, #tpu.memory_space<vmem>>, %arg2: memref<32x128xf32, #tpu.memory_space<vmem>>, %arg3: memref<1x128xf32, #tpu.memory_space<vmem>>, %arg4: memref<128x128xf32, #tpu.memory_space<vmem>>, %arg5: memref<1x128xf32, #tpu.memory_space<vmem>>, %arg6: memref<128x128xf32, #tpu.memory_space<vmem>>, %arg7: memref<1x128xf32, #tpu.memory_space<vmem>>, %arg8: memref<8x45xf32, #tpu.memory_space<vmem>>) attributes {dimension_semantics = [#tpu.dimension_semantics<parallel>], iteration_bounds = array<i64: 1>, scalar_prefetch = 0 : i64, scratch_operands = 0 : i64, tpu.core_type = #tpu.core_type<tc>, window_params = [{transform_indices = @transform_0, window_bounds = array<i64: 8, 32>}, {pipeline_mode = #tpu.pipeline_mode<synchronous>, transform_indices = @transform_1, window_bounds = array<i64: 32, 128>}, {pipeline_mode = #tpu.pipeline_mode<synchronous>, transform_indices = @transform_2, window_bounds = array<i64: 1, 128>}, {pipeline_mode = #tpu.pipeline_mode<synchronous>, transform_indices = @transform_3, window_bounds = array<i64: 128, 128>}, {pipeline_mode = #tpu.pipeline_mode<synchronous>, transform_indices = @transform_4, window_bounds = array<i64: 1, 128>}, {pipeline_mode = #tpu.pipeline_mode<synchronous>, transform_indices = @transform_5, window_bounds = array<i64: 128, 128>}, {pipeline_mode = #tpu.pipeline_mode<synchronous>, transform_indices = @transform_6, window_bounds = array<i64: 1, 128>}, {transform_indices = @transform_7, window_bounds = array<i64: 8, 45>}]} {
    %c0 = arith.constant 0 : index
    %c0_0 = arith.constant 0 : index
    %0 = vector.load %arg1[%c0, %c0_0] : memref<8x32xf32, #tpu.memory_space<vmem>>, vector<8x32xf32>
    %c0_1 = arith.constant 0 : index
    %c0_2 = arith.constant 0 : index
    %1 = vector.load %arg2[%c0_1, %c0_2] : memref<32x128xf32, #tpu.memory_space<vmem>>, vector<32x128xf32>
    %cst = arith.constant dense<0.000000e+00> : vector<8x128xf32>
    %2 = tpu.matmul %0, %1, %cst {dimension_numbers = #tpu.dot_dimension_numbers<[1], [0], [0], [1], [0, 0, 1, 1], [], []>} : vector<8x32xf32>, vector<32x128xf32>, vector<8x128xf32> -> vector<8x128xf32>
    %c0_3 = arith.constant 0 : index
    %c0_4 = arith.constant 0 : index
    %3 = vector.load %arg3[%c0_3, %c0_4] : memref<1x128xf32, #tpu.memory_space<vmem>>, vector<1x128xf32>
    %4 = vector.broadcast %3 : vector<1x128xf32> to vector<8x128xf32>
    %5 = arith.addf %2, %4 : vector<8x128xf32>
    %cst_5 = arith.constant 0.00999999977 : f32
    %6 = vector.broadcast %cst_5 : f32 to vector<8x128xf32>
    %7 = arith.mulf %6, %5 : vector<8x128xf32>
    %8 = arith.maximumf %5, %7 : vector<8x128xf32>
    %c0_6 = arith.constant 0 : index
    %c0_7 = arith.constant 0 : index
    %9 = vector.load %arg4[%c0_6, %c0_7] : memref<128x128xf32, #tpu.memory_space<vmem>>, vector<128x128xf32>
    %cst_8 = arith.constant dense<0.000000e+00> : vector<8x128xf32>
    %10 = tpu.matmul %8, %9, %cst_8 {dimension_numbers = #tpu.dot_dimension_numbers<[1], [0], [0], [1], [0, 0, 1, 1], [], []>} : vector<8x128xf32>, vector<128x128xf32>, vector<8x128xf32> -> vector<8x128xf32>
    %c0_9 = arith.constant 0 : index
    %c0_10 = arith.constant 0 : index
    %11 = vector.load %arg5[%c0_9, %c0_10] : memref<1x128xf32, #tpu.memory_space<vmem>>, vector<1x128xf32>
    %12 = vector.broadcast %11 : vector<1x128xf32> to vector<8x128xf32>
    %13 = arith.addf %10, %12 : vector<8x128xf32>
    %cst_11 = arith.constant 0.00999999977 : f32
    %14 = vector.broadcast %cst_11 : f32 to vector<8x128xf32>
    %15 = arith.mulf %14, %13 : vector<8x128xf32>
    %16 = arith.maximumf %13, %15 : vector<8x128xf32>
    %c0_12 = arith.constant 0 : index
    %c0_13 = arith.constant 0 : index
    %17 = vector.load %arg6[%c0_12, %c0_13] : memref<128x128xf32, #tpu.memory_space<vmem>>, vector<128x128xf32>
    %cst_14 = arith.constant dense<0.000000e+00> : vector<8x128xf32>
    %18 = tpu.matmul %16, %17, %cst_14 {dimension_numbers = #tpu.dot_dimension_numbers<[1], [0], [0], [1], [0, 0, 1, 1], [], []>} : vector<8x128xf32>, vector<128x128xf32>, vector<8x128xf32> -> vector<8x128xf32>
    %c0_15 = arith.constant 0 : index
    %c0_16 = arith.constant 0 : index
    %19 = vector.load %arg7[%c0_15, %c0_16] : memref<1x128xf32, #tpu.memory_space<vmem>>, vector<1x128xf32>
    %20 = vector.broadcast %19 : vector<1x128xf32> to vector<8x128xf32>
    %21 = arith.addf %18, %20 : vector<8x128xf32>
    %22 = vector.extract_strided_slice %21 {offsets = [0, 0], sizes = [8, 45], strides = [1, 1]} : vector<8x128xf32> to vector<8x45xf32>
    %c0_17 = arith.constant 0 : index
    %c0_18 = arith.constant 0 : index
    %23 = vector.load %arg8[%c0_17, %c0_18] : memref<8x45xf32, #tpu.memory_space<vmem>>, vector<8x45xf32>
    tpu.vector_store %arg8[%c0_17, %c0_18], %22 {strides = array<i32>} : memref<8x45xf32, #tpu.memory_space<vmem>>, vector<8x45xf32>,
    return
  }
  func.func @transform_0(%arg0: i32) -> (i32, i32) {
    %c0_i32 = arith.constant 0 : i32
    %c0_i32_0 = arith.constant 0 : i32
    return %arg0, %c0_i32 : i32, i32
  }
  func.func @transform_1(%arg0: i32) -> (i32, i32) {
    %c0_i32 = arith.constant 0 : i32
    %c0_i32_0 = arith.constant 0 : i32
    %c0_i32_1 = arith.constant 0 : i32
    return %c0_i32, %c0_i32_0 : i32, i32
  }
  func.func @transform_2(%arg0: i32) -> (i32, i32) {
    %c0_i32 = arith.constant 0 : i32
    %c0_i32_0 = arith.constant 0 : i32
    %c0_i32_1 = arith.constant 0 : i32
    return %c0_i32, %c0_i32_0 : i32, i32
  }
  func.func @transform_3(%arg0: i32) -> (i32, i32) {
    %c0_i32 = arith.constant 0 : i32
    %c0_i32_0 = arith.constant 0 : i32
    %c0_i32_1 = arith.constant 0 : i32
    return %c0_i32, %c0_i32_0 : i32, i32
  }
  func.func @transform_4(%arg0: i32) -> (i32, i32) {
    %c0_i32 = arith.constant 0 : i32
    %c0_i32_0 = arith.constant 0 : i32
    %c0_i32_1 = arith.constant 0 : i32
    return %c0_i32, %c0_i32_0 : i32, i32
  }
  func.func @transform_5(%arg0: i32) -> (i32, i32) {
    %c0_i32 = arith.constant 0 : i32
    %c0_i32_0 = arith.constant 0 : i32
    %c0_i32_1 = arith.constant 0 : i32
    return %c0_i32, %c0_i32_0 : i32, i32
  }
  func.func @transform_6(%arg0: i32) -> (i32, i32) {
    %c0_i32 = arith.constant 0 : i32
    %c0_i32_0 = arith.constant 0 : i32
    %c0_i32_1 = arith.constant 0 : i32
    return %c0_i32, %c0_i32_0 : i32, i32
  }
  func.func @transform_7(%arg0: i32) -> (i32, i32) {
    %c0_i32 = arith.constant 0 : i32
    %c0_i32_0 = arith.constant 0 : i32
    return %arg0, %c0_i32 : i32, i32
  }
}

</mosaic_0001>

<llo_original>
// kernel: gmm_net_forward.1
$region0: #{gmm_net_forward.1}
  #allocation0 [shape = 'u32[]', space=smem, size = 0x4, offset = 0x4, fixed_abs, tag = 'smem constant byte address 0x4 - core index']
  #allocation1 [shape = 'u32[144,128]{1,0:T(1,128)}', space=vmem, size = 0x12000, scoped, tag = 'internal scratch']
  %s0 = inlined_call_operand.hbm [shape: f32[8,32], index: 0, kind: input, shape index: {}]
  %s1 = inlined_call_operand.hbm [shape: f32[32,128], index: 1, kind: input, shape index: {}]
  %s2 = inlined_call_operand.vmem [shape: f32[1,128], index: 2, kind: input, shape index: {}]
  %s3 = inlined_call_operand.hbm [shape: f32[128,128], index: 3, kind: input, shape index: {}]
  %s4 = inlined_call_operand.vmem [shape: f32[1,128], index: 4, kind: input, shape index: {}]
  %s5 = inlined_call_operand.hbm [shape: f32[128,128], index: 5, kind: input, shape index: {}]
  %s6 = inlined_call_operand.vmem [shape: f32[1,128], index: 6, kind: input, shape index: {}]
  %s7 = inlined_call_operand.hbm [shape: f32[8,45], index: 7, kind: output, shape index: {}]
  %s8 = sld [smem:[#allocation0]]
  $region54: #{gmm_net_forward.1} parent=0
    _
  %s10 = ssub.s32 1, %s8
  %s11 = scalar_select 0, %s10, %s8
  $region1: #{gmm_net_forward.1} parent=0
    #allocation2 [shape = 'u8[4096]{0}', space=vmem, size = 0x1000, scoped, tag = 'input window, operand 0, single buffered']
    #allocation3 [shape = 's32[1]{0}', space=sflag, size = 0x4, scoped, tag = 'scoped memory for gmm_net_forward.1']
    #allocation4 [shape = 's32[1]{0}', space=sflag, size = 0x4, scoped, tag = 'scoped memory for gmm_net_forward.1']
    #allocation5 [shape = 'u8[16384]{0}', space=vmem, size = 0x4000, scoped, tag = 'input window, operand 1, single buffered']
    #allocation6 [shape = 's32[1]{0}', space=sflag, size = 0x4, scoped, tag = 'scoped memory for gmm_net_forward.1']
    #allocation7 [shape = 'u8[65536]{0}', space=vmem, size = 0x10000, scoped, tag = 'input window, operand 3, single buffered']
    #allocation8 [shape = 'u8[65536]{0}', space=vmem, size = 0x10000, scoped, tag = 'input window, operand 5, single buffered']
    #allocation9 [shape = 's32[1]{0}', space=sflag, size = 0x4, scoped, tag = 'scoped memory for gmm_net_forward.1']
    #allocation10 [shape = 'u8[4096]{0}', space=vmem, size = 0x1000, scoped, tag = 'output window, operand 0, single buffered']
    %12 = vsyncpa [#allocation3], 0
    %13 = vsyncpa [#allocation6], 0
    %14 = vsyncpa [#allocation9], 0
    %15 = vsyncpa [#allocation4], 0
    // Predicated region
    $region2: #{gmm_net_forward.1} parent=1 // pred_check
      _
    $region3: #{gmm_net_forward.1} parent=1 // pred_check_branch
      %17 = sbr.rel (0) target = $region5
    $region4: #{gmm_net_forward.1} parent=1 // pred_region
      %s19 = ssub.s32 128, 128
      %20 = vsyncadd [#allocation3], %s19
      %s22 = sshll.u32 [#allocation2], 4
      %s23 = int_to_ptr.vmem [resolvable:$true] %s22
      %25 = dma.hbm_to_vmem [thread:$0]  %s0, 128, %s23, [#allocation3]
    $region5: #{gmm_net_forward.1} parent=1 // pred_fallthru
      _
    // Predicated region
    $region6: #{gmm_net_forward.1} parent=1 // pred_check
      _
    $region7: #{gmm_net_forward.1} parent=1 // pred_check_branch
      %27 = sbr.rel (0) target = $region9
    $region8: #{gmm_net_forward.1} parent=1 // pred_region
      %s29 = ssub.s32 512, 512
      %30 = vsyncadd [#allocation6], %s29
      %s31 = sshll.u32 [#allocation5], 4
      %s32 = int_to_ptr.vmem [resolvable:$true] %s31
      %37 = dma.hbm_to_vmem [thread:$0]  %s1, 512, %s32, [#allocation6], 128, 128, 8
    $region9: #{gmm_net_forward.1} parent=1 // pred_fallthru
      _
    // Predicated region
    $region10: #{gmm_net_forward.1} parent=1 // pred_check
      _
    $region11: #{gmm_net_forward.1} parent=1 // pred_check_branch
      %39 = sbr.rel (0) target = $region13
    $region12: #{gmm_net_forward.1} parent=1 // pred_region
      _
    $region13: #{gmm_net_forward.1} parent=1 // pred_fallthru
      _
    // Predicated region
    $region14: #{gmm_net_forward.1} parent=1 // pred_check
      _
    $region15: #{gmm_net_forward.1} parent=1 // pred_check_branch
      %41 = sbr.rel (0) target = $region17
    $region16: #{gmm_net_forward.1} parent=1 // pred_region
      %s43 = ssub.s32 2048, 2048
      %44 = vsyncadd [#allocation6], %s43
      %s45 = sshll.u32 [#allocation7], 4
      %s46 = int_to_ptr.vmem [resolvable:$true] %s45
      %51 = dma.hbm_to_vmem [thread:$0]  %s3, 2048, %s46, [#allocation6], 128, 128, 8
    $region17: #{gmm_net_forward.1} parent=1 // pred_fallthru
      _
    // Predicated region
    $region18: #{gmm_net_forward.1} parent=1 // pred_check
      _
    $region19: #{gmm_net_forward.1} parent=1 // pred_check_branch
      %53 = sbr.rel (0) target = $region21
    $region20: #{gmm_net_forward.1} parent=1 // pred_region
      _
    $region21: #{gmm_net_forward.1} parent=1 // pred_fallthru
      _
    // Predicated region
    $region22: #{gmm_net_forward.1} parent=1 // pred_check
      _
    $region23: #{gmm_net_forward.1} parent=1 // pred_check_branch
      %55 = sbr.rel (0) target = $region25
    $region24: #{gmm_net_forward.1} parent=1 // pred_region
      %s57 = ssub.s32 2048, 2048
      %58 = vsyncadd [#allocation9], %s57
      %s59 = sshll.u32 [#allocation8], 4
      %s60 = int_to_ptr.vmem [resolvable:$true] %s59
      %65 = dma.hbm_to_vmem [thread:$0]  %s5, 2048, %s60, [#allocation9], 128, 128, 8
    $region25: #{gmm_net_forward.1} parent=1 // pred_fallthru
      _
    // Predicated region
    $region26: #{gmm_net_forward.1} parent=1 // pred_check
      _
    $region27: #{gmm_net_forward.1} parent=1 // pred_check_branch
      %67 = sbr.rel (0) target = $region29
    $region28: #{gmm_net_forward.1} parent=1 // pred_region
      _
    $region29: #{gmm_net_forward.1} parent=1 // pred_fallthru
      _
    // Predicated region
    $region30: #{gmm_net_forward.1} parent=1 // pred_check
      _
    $region31: #{gmm_net_forward.1} parent=1 // pred_check_branch
      %69 = sbr.rel (0) target = $region33
    $region32: #{gmm_net_forward.1} parent=1 // pred_region
      %70 = dma.done [#allocation3], 128
    $region33: #{gmm_net_forward.1} parent=1 // pred_fallthru
      _
    // Predicated region
    $region34: #{gmm_net_forward.1} parent=1 // pred_check
      _
    $region35: #{gmm_net_forward.1} parent=1 // pred_check_branch
      %72 = sbr.rel (0) target = $region37
    $region36: #{gmm_net_forward.1} parent=1 // pred_region
      %73 = dma.done [#allocation6], 512
    $region37: #{gmm_net_forward.1} parent=1 // pred_fallthru
      _
    // Predicated region
    $region38: #{gmm_net_forward.1} parent=1 // pred_check
      _
    $region39: #{gmm_net_forward.1} parent=1 // pred_check_branch
      %75 = sbr.rel (0) target = $region41
    $region40: #{gmm_net_forward.1} parent=1 // pred_region
      %76 = dma.done [#allocation6], 2048
    $region41: #{gmm_net_forward.1} parent=1 // pred_fallthru
      _
    // Predicated region
    $region42: #{gmm_net_forward.1} parent=1 // pred_check
      _
    $region43: #{gmm_net_forward.1} parent=1 // pred_check_branch
      %78 = sbr.rel (0) target = $region45
    $region44: #{gmm_net_forward.1} parent=1 // pred_region
      %79 = dma.done [#allocation9], 2048
    $region45: #{gmm_net_forward.1} parent=1 // pred_fallthru
      _
    %v80 = vld [vmem:[#allocation2] sm:$0xff]
    %v81 = vld [vmem:[#allocation5] sm:$0xff]
    %v82 = vld [vmem:[#allocation5 + $0x8] sm:$0xff]
    %v83 = vld [vmem:[#allocation5 + $0x10] sm:$0xff]
    %v84 = vld [vmem:[#allocation5 + $0x18] sm:$0xff]
    %v85 = vld [vmem:[%s2] sm:$0x1]
    %v87 = vlaneseq
    %v88 = vshrl.u32 %v87, 7
    %v89 = vsub.s32 0, %v88
    %v90 = vrot.slane %v85, %v89
    %vm92 = vcmask 261120
    %v94 = vsel %vm92, %v80, 0
    %96 = vmatprep.subr.mxu0 0.0
    %97 = vmatpush1.msra.mxu0 %v81
    %98 = vmatprep.subr.mxu0 0.0
    %99 = vmatpush1.msra.mxu0 %v82
    %100 = vmatprep.subr.mxu0 0.0
    %101 = vmatpush1.msra.mxu0 %v83
    %102 = vmatprep.subr.mxu0 0.0
    %103 = vmatpush1.msra.mxu0 %v84
    %104 = vmatprep.subr.mxu0 0.0
    %105 = vmatpush1.msra.mxu0 0.0
    %106 = vmatprep.subr.mxu0 0.0
    %107 = vmatpush1.msra.mxu0 0.0
    %108 = vmatprep.subr.mxu0 0.0
    %109 = vmatpush1.msra.mxu0 0.0
    %110 = vmatprep.subr.mxu0 0.0
    %111 = vmatpush1.msra.mxu0 0.0
    %112 = vmatprep.subr.mxu0 0.0
    %113 = vmatpush1.msra.mxu0 0.0
    %114 = vmatprep.subr.mxu0 0.0
    %115 = vmatpush1.msra.mxu0 0.0
    %116 = vmatprep.subr.mxu0 0.0
    %117 = vmatpush1.msra.mxu0 0.0
    %118 = vmatprep.subr.mxu0 0.0
    %119 = vmatpush1.msra.mxu0 0.0
    %120 = vmatprep.subr.mxu0 0.0
    %121 = vmatpush1.msra.mxu0 0.0
    %122 = vmatprep.subr.mxu0 0.0
    %123 = vmatpush1.msra.mxu0 0.0
    %124 = vmatprep.subr.mxu0 0.0
    %125 = vmatpush1.msra.mxu0 0.0
    %126 = vmatprep.subr.mxu0 0.0
    %127 = vmatpush1.msra.mxu0 0.0
    %128 = vmatprep.subr.mxu0 0.0
    %129 = vmatpush1.msra.mxu0 0.0
    %130 = vmatprep.subr.mxu0 0.0
    %131 = vmatpush1.msra.mxu0 0.0
    %132 = vmatprep.subr.mxu0 0.0
    %133 = vmatpush1.msra.mxu0 0.0
    %134 = vmatprep.subr.mxu0 0.0
    %135 = vmatpush1.msra.mxu0 0.0
    %136 = vmatprep.subr.mxu0 0.0
    %137 = vmatpush1.msra.mxu0 0.0
    %138 = vmatprep.subr.mxu0 0.0
    %139 = vmatpush1.msra.mxu0 0.0
    %140 = vmatprep.subr.mxu0 0.0
    %141 = vmatpush1.msra.mxu0 0.0
    %142 = vmatprep.subr.mxu0 0.0
    %143 = vmatpush1.msra.mxu0 0.0
    %144 = vmatprep.subr.mxu0 0.0
    %145 = vmatpush1.msra.mxu0 0.0
    %146 = vmatprep.subr.mxu0 0.0
    %147 = vmatpush1.msra.mxu0 0.0
    %148 = vmatprep.subr.mxu0 0.0
    %149 = vmatpush1.msra.mxu0 0.0
    %150 = vmatprep.subr.mxu0 0.0
    %151 = vmatpush1.msra.mxu0 0.0
    %152 = vmatprep.subr.mxu0 0.0
    %153 = vmatpush1.msra.mxu0 0.0
    %154 = vmatprep.subr.mxu0 0.0
    %155 = vmatpush1.msra.mxu0 0.0
    %156 = vmatprep.subr.mxu0 0.0
    %157 = vmatpush1.msra.mxu0 0.0
    %158 = vmatprep.subr.mxu0 0.0
    %159 = vmatpush1.msra.mxu0 0.0
    %160 = vmatprep.mubr.f32.mxu0 0.0
    %161 = vmatmul.mubr.f32.gmra.mrb[0].mxu0 %v94
    %v162 = vpop.f32.mrb[0].mxu0
    %v163 = vadd.f32 %v90, %v162
    %v164 = vpop.f32.mrb[0].mxu0
    %165 = vdwg.mxu0
    %v166 = vmul.f32 %v163, 0.01
    %v167 = vmax.f32 %v163, %v166
    %v168 = vld [vmem:[#allocation7] sm:$0xff]
    %v169 = vld [vmem:[#allocation7 + $0x8] sm:$0xff]
    %v170 = vld [vmem:[#allocation7 + $0x10] sm:$0xff]
    %v171 = vld [vmem:[#allocation7 + $0x18] sm:$0xff]
    %v172 = vld [vmem:[#allocation7 + $0x20] sm:$0xff]
    %v173 = vld [vmem:[#allocation7 + $0x28] sm:$0xff]
    %v174 = vld [vmem:[#allocation7 + $0x30] sm:$0xff]
    %v175 = vld [vmem:[#allocation7 + $0x38] sm:$0xff]
    %v176 = vld [vmem:[#allocation7 + $0x40] sm:$0xff]
    %v177 = vld [vmem:[#allocation7 + $0x48] sm:$0xff]
    %v178 = vld [vmem:[#allocation7 + $0x50] sm:$0xff]
    %v179 = vld [vmem:[#allocation7 + $0x58] sm:$0xff]
    %v180 = vld [vmem:[#allocation7 + $0x60] sm:$0xff]
    %v181 = vld [vmem:[#allocation7 + $0x68] sm:$0xff]
    %v182 = vld [vmem:[#allocation7 + $0x70] sm:$0xff]
    %v183 = vld [vmem:[#allocation7 + $0x78] sm:$0xff]
    %v184 = vld [vmem:[%s4] sm:$0x1]
    %v186 = vlaneseq
    %v187 = vshrl.u32 %v186, 7
    %v188 = vsub.s32 0, %v187
    %v189 = vrot.slane %v184, %v188
    %191 = vmatprep.subr.mxu0 0.0
    %192 = vmatpush1.msra.mxu0 %v168
    %193 = vmatprep.subr.mxu0 0.0
    %194 = vmatpush1.msra.mxu0 %v169
    %195 = vmatprep.subr.mxu0 0.0
    %196 = vmatpush1.msra.mxu0 %v170
    %197 = vmatprep.subr.mxu0 0.0
    %198 = vmatpush1.msra.mxu0 %v171
    %199 = vmatprep.subr.mxu0 0.0
    %200 = vmatpush1.msra.mxu0 %v172
    %201 = vmatprep.subr.mxu0 0.0
    %202 = vmatpush1.msra.mxu0 %v173
    %203 = vmatprep.subr.mxu0 0.0
    %204 = vmatpush1.msra.mxu0 %v174
    %205 = vmatprep.subr.mxu0 0.0
    %206 = vmatpush1.msra.mxu0 %v175
    %207 = vmatprep.subr.mxu0 0.0
    %208 = vmatpush1.msra.mxu0 %v176
    %209 = vmatprep.subr.mxu0 0.0
    %210 = vmatpush1.msra.mxu0 %v177
    %211 = vmatprep.subr.mxu0 0.0
    %212 = vmatpush1.msra.mxu0 %v178
    %213 = vmatprep.subr.mxu0 0.0
    %214 = vmatpush1.msra.mxu0 %v179
    %215 = vmatprep.subr.mxu0 0.0
    %216 = vmatpush1.msra.mxu0 %v180
    %217 = vmatprep.subr.mxu0 0.0
    %218 = vmatpush1.msra.mxu0 %v181
    %219 = vmatprep.subr.mxu0 0.0
    %220 = vmatpush1.msra.mxu0 %v182
    %221 = vmatprep.subr.mxu0 0.0
    %222 = vmatpush1.msra.mxu0 %v183
    %223 = vmatprep.subr.mxu0 0.0
    %224 = vmatpush1.msra.mxu0 0.0
    %225 = vmatprep.subr.mxu0 0.0
    %226 = vmatpush1.msra.mxu0 0.0
    %227 = vmatprep.subr.mxu0 0.0
    %228 = vmatpush1.msra.mxu0 0.0
    %229 = vmatprep.subr.mxu0 0.0
    %230 = vmatpush1.msra.mxu0 0.0
    %231 = vmatprep.subr.mxu0 0.0
    %232 = vmatpush1.msra.mxu0 0.0
    %233 = vmatprep.subr.mxu0 0.0
    %234 = vmatpush1.msra.mxu0 0.0
    %235 = vmatprep.subr.mxu0 0.0
    %236 = vmatpush1.msra.mxu0 0.0
    %237 = vmatprep.subr.mxu0 0.0
    %238 = vmatpush1.msra.mxu0 0.0
    %239 = vmatprep.subr.mxu0 0.0
    %240 = vmatpush1.msra.mxu0 0.0
    %241 = vmatprep.subr.mxu0 0.0
    %242 = vmatpush1.msra.mxu0 0.0
    %243 = vmatprep.subr.mxu0 0.0
    %244 = vmatpush1.msra.mxu0 0.0
    %245 = vmatprep.subr.mxu0 0.0
    %246 = vmatpush1.msra.mxu0 0.0
    %247 = vmatprep.subr.mxu0 0.0
    %248 = vmatpush1.msra.mxu0 0.0
    %249 = vmatprep.subr.mxu0 0.0
    %250 = vmatpush1.msra.mxu0 0.0
    %251 = vmatprep.subr.mxu0 0.0
    %252 = vmatpush1.msra.mxu0 0.0
    %253 = vmatprep.subr.mxu0 0.0
    %254 = vmatpush1.msra.mxu0 0.0
    %255 = vmatprep.mubr.f32.mxu0 0.0
    %256 = vmatmul.mubr.f32.gmra.mrb[0].mxu0 %v167
    %v257 = vpop.f32.mrb[0].mxu0
    %v258 = vadd.f32 %v189, %v257
    %v259 = vpop.f32.mrb[0].mxu0
    %260 = vdwg.mxu0
    %v261 = vmul.f32 %v258, 0.01
    %v262 = vmax.f32 %v258, %v261
    %v263 = vld [vmem:[#allocation8] sm:$0xff]
    %v264 = vld [vmem:[#allocation8 + $0x8] sm:$0xff]
    %v265 = vld [vmem:[#allocation8 + $0x10] sm:$0xff]
    %v266 = vld [vmem:[#allocation8 + $0x18] sm:$0xff]
    %v267 = vld [vmem:[#allocation8 + $0x20] sm:$0xff]
    %v268 = vld [vmem:[#allocation8 + $0x28] sm:$0xff]
    %v269 = vld [vmem:[#allocation8 + $0x30] sm:$0xff]
    %v270 = vld [vmem:[#allocation8 + $0x38] sm:$0xff]
    %v271 = vld [vmem:[#allocation8 + $0x40] sm:$0xff]
    %v272 = vld [vmem:[#allocation8 + $0x48] sm:$0xff]
    %v273 = vld [vmem:[#allocation8 + $0x50] sm:$0xff]
    %v274 = vld [vmem:[#allocation8 + $0x58] sm:$0xff]
    %v275 = vld [vmem:[#allocation8 + $0x60] sm:$0xff]
    %v276 = vld [vmem:[#allocation8 + $0x68] sm:$0xff]
    %v277 = vld [vmem:[#allocation8 + $0x70] sm:$0xff]
    %v278 = vld [vmem:[#allocation8 + $0x78] sm:$0xff]
    %v279 = vld [vmem:[%s6] sm:$0x1]
    %v281 = vlaneseq
    %v282 = vshrl.u32 %v281, 7
    %v283 = vsub.s32 0, %v282
    %v284 = vrot.slane %v279, %v283
    %286 = vmatprep.subr.mxu0 0.0
    %287 = vmatpush1.msra.mxu0 %v263
    %288 = vmatprep.subr.mxu0 0.0
    %289 = vmatpush1.msra.mxu0 %v264
    %290 = vmatprep.subr.mxu0 0.0
    %291 = vmatpush1.msra.mxu0 %v265
    %292 = vmatprep.subr.mxu0 0.0
    %293 = vmatpush1.msra.mxu0 %v266
    %294 = vmatprep.subr.mxu0 0.0
    %295 = vmatpush1.msra.mxu0 %v267
    %296 = vmatprep.subr.mxu0 0.0
    %297 = vmatpush1.msra.mxu0 %v268
    %298 = vmatprep.subr.mxu0 0.0
    %299 = vmatpush1.msra.mxu0 %v269
    %300 = vmatprep.subr.mxu0 0.0
    %301 = vmatpush1.msra.mxu0 %v270
    %302 = vmatprep.subr.mxu0 0.0
    %303 = vmatpush1.msra.mxu0 %v271
    %304 = vmatprep.subr.mxu0 0.0
    %305 = vmatpush1.msra.mxu0 %v272
    %306 = vmatprep.subr.mxu0 0.0
    %307 = vmatpush1.msra.mxu0 %v273
    %308 = vmatprep.subr.mxu0 0.0
    %309 = vmatpush1.msra.mxu0 %v274
    %310 = vmatprep.subr.mxu0 0.0
    %311 = vmatpush1.msra.mxu0 %v275
    %312 = vmatprep.subr.mxu0 0.0
    %313 = vmatpush1.msra.mxu0 %v276
    %314 = vmatprep.subr.mxu0 0.0
    %315 = vmatpush1.msra.mxu0 %v277
    %316 = vmatprep.subr.mxu0 0.0
    %317 = vmatpush1.msra.mxu0 %v278
    %318 = vmatprep.subr.mxu0 0.0
    %319 = vmatpush1.msra.mxu0 0.0
    %320 = vmatprep.subr.mxu0 0.0
    %321 = vmatpush1.msra.mxu0 0.0
    %322 = vmatprep.subr.mxu0 0.0
    %323 = vmatpush1.msra.mxu0 0.0
    %324 = vmatprep.subr.mxu0 0.0
    %325 = vmatpush1.msra.mxu0 0.0
    %326 = vmatprep.subr.mxu0 0.0
    %327 = vmatpush1.msra.mxu0 0.0
    %328 = vmatprep.subr.mxu0 0.0
    %329 = vmatpush1.msra.mxu0 0.0
    %330 = vmatprep.subr.mxu0 0.0
    %331 = vmatpush1.msra.mxu0 0.0
    %332 = vmatprep.subr.mxu0 0.0
    %333 = vmatpush1.msra.mxu0 0.0
    %334 = vmatprep.subr.mxu0 0.0
    %335 = vmatpush1.msra.mxu0 0.0
    %336 = vmatprep.subr.mxu0 0.0
    %337 = vmatpush1.msra.mxu0 0.0
    %338 = vmatprep.subr.mxu0 0.0
    %339 = vmatpush1.msra.mxu0 0.0
    %340 = vmatprep.subr.mxu0 0.0
    %341 = vmatpush1.msra.mxu0 0.0
    %342 = vmatprep.subr.mxu0 0.0
    %343 = vmatpush1.msra.mxu0 0.0
    %344 = vmatprep.subr.mxu0 0.0
    %345 = vmatpush1.msra.mxu0 0.0
    %346 = vmatprep.subr.mxu0 0.0
    %347 = vmatpush1.msra.mxu0 0.0
    %348 = vmatprep.subr.mxu0 0.0
    %349 = vmatpush1.msra.mxu0 0.0
    %350 = vmatprep.mubr.f32.mxu0 0.0
    %351 = vmatmul.mubr.f32.gmra.mrb[0].mxu0 %v262
    %v352 = vpop.f32.mrb[0].mxu0
    %v353 = vadd.f32 %v284, %v352
    %v354 = vpop.f32.mrb[0].mxu0
    %355 = vdwg.mxu0
    %vm356 = vcmask 367616
    %357 = vst.msk [vmem:[#allocation10] sm:$0xff] %vm356, %v353
    // Predicated region
    $region46: #{gmm_net_forward.1} parent=1 // pred_check
      _
    $region47: #{gmm_net_forward.1} parent=1 // pred_check_branch
      %359 = sbr.rel (0) target = $region49
    $region48: #{gmm_net_forward.1} parent=1 // pred_region
      %s361 = ssub.s32 128, 128
      %362 = vsyncadd [#allocation4], %s361
      %s364 = sshll.u32 [#allocation10], 4
      %s365 = int_to_ptr.vmem [resolvable:$true] %s364
      %367 = dma.vmem_to_hbm [thread:$0]  %s365, 128, %s7, [#allocation4]
    $region49: #{gmm_net_forward.1} parent=1 // pred_fallthru
      _
    // Predicated region
    $region50: #{gmm_net_forward.1} parent=1 // pred_check
      _
    $region51: #{gmm_net_forward.1} parent=1 // pred_check_branch
      %369 = sbr.rel (0) target = $region53
    $region52: #{gmm_net_forward.1} parent=1 // pred_region
      %370 = dma.done [#allocation4], 128
    $region53: #{gmm_net_forward.1} parent=1 // pred_fallthru
      _
    %371 = vsyncpa [#allocation3], 1
    %372 = vsyncpa [#allocation6], 1
    %373 = vsyncpa [#allocation9], 1
    %374 = vsyncpa [#allocation4], 1

</llo_original>
